<compile_context>
chip_gen: v7x
topology: tpu7x:2x2x1
jax: 0.10.0
libtpu: 0.0.40
codegen_flags: <defaults>
</compile_context>

<pallas_src>
import functools

import jax
import jax.numpy as jnp
from jax.experimental import pallas as pl
from jax.experimental.pallas import tpu as pltpu


def _round_up(x, m):
    return (x + m - 1) // m * m


def _rnn_seq_kernel(x_ref, h0_ref, wi_ref, wh_ref, b_ref,
                    out_ref, hid_ref, h_scr, *, hp, o_logical):
    """One timestep per grid iteration.

    hidden_t = x_t @ W_i[:, :H] + h_{t-1} @ W_h[:, :H] + b[:, :H]
    logits_t = x_t @ W_i[:, H:] + h_{t-1} @ W_h[:, H:] + b[:, H:]
    out_t    = log_softmax(logits_t) over the logical O lanes
    """
    t = pl.program_id(0)

    # Initialize the resident hidden state once.
    @pl.when(t == 0)
    def _():
        h_scr[...] = h0_ref[...]

    x = x_ref[0]                # (BP, I)
    h = h_scr[...]              # (BP, HP)

    # Single fused matmul per operand against the packed [Wh | Wo] weights.
    packed = (jnp.dot(x, wi_ref[...], preferred_element_type=jnp.float32)
              + jnp.dot(h, wh_ref[...], preferred_element_type=jnp.float32)
              + b_ref[...])     # (BP, HP + OP)

    new_h = packed[:, :hp]      # (BP, HP)  -- static, 128-lane-aligned slice
    logits = packed[:, hp:]     # (BP, OP)

    # Log-softmax over the logical O columns only (padded lanes masked out).
    lane = jax.lax.broadcasted_iota(jnp.int32, logits.shape, 1)
    valid = lane < o_logical
    masked = jnp.where(valid, logits, -jnp.inf)
    m = jnp.max(masked, axis=1, keepdims=True)
    shifted = masked - m
    lse = jnp.log(jnp.sum(jnp.exp(shifted), axis=1, keepdims=True))
    logprobs = jnp.where(valid, shifted - lse, 0.0)

    # Carry hidden in VMEM; emit lane-dense per-step outputs.
    h_scr[...] = new_h
    hid_ref[0] = new_h.astype(hid_ref.dtype)
    out_ref[0] = logprobs.astype(out_ref.dtype)


@jax.jit
def rnn_sequence_forward(x_seq, h0, wh_t, bh, wo_t, bo):
    """Apply the RNN cell over a (T, B, I) sequence with the recurrence in-kernel.

    Returns (out_seq, hid_seq) of shapes (T, B, O) and (T, B, H) — i.e. the
    module's forward applied T times.
    """
    T, B, I = x_seq.shape
    H = wh_t.shape[1]
    O = wo_t.shape[1]

    BP = _round_up(max(B, 8), 8)      # fill sublanes
    HP = _round_up(H, 128)            # 128-lane-aligned hidden block
    OP = _round_up(O, 128)            # lane-dense output block
    P = HP + OP

    # Split the (I+H, .) linear weights into input-part / hidden-part and pack
    # i2h / i2o along the output dim (zero-padded so the split is tile-aligned).
    w_ih, w_hh = wh_t[:I], wh_t[I:]
    w_io, w_ho = wo_t[:I], wo_t[I:]

    w_in_packed = (jnp.zeros((I, P), jnp.float32)
                   .at[:, :H].set(w_ih)
                   .at[:, HP:HP + O].set(w_io))
    w_hid_packed = (jnp.zeros((HP, P), jnp.float32)
                    .at[:H, :H].set(w_hh)
                    .at[:H, HP:HP + O].set(w_ho))
    b_packed = (jnp.zeros((1, P), jnp.float32)
                .at[:, :H].set(bh)
                .at[:, HP:HP + O].set(bo))

    # Pad batch / hidden so every block is (8,128)-friendly.
    x_p = jnp.zeros((T, BP, I), jnp.float32).at[:, :B, :].set(x_seq)
    h0_p = jnp.zeros((BP, HP), jnp.float32).at[:B, :H].set(h0)

    kernel = functools.partial(_rnn_seq_kernel, hp=HP, o_logical=O)

    out_seq, hid_seq = pl.pallas_call(
        kernel,
        out_shape=(
            jax.ShapeDtypeStruct((T, BP, OP), jnp.float32),
            jax.ShapeDtypeStruct((T, BP, HP), jnp.float32),
        ),
        grid_spec=pltpu.PrefetchScalarGridSpec(
            num_scalar_prefetch=0,
            grid=(T,),
            in_specs=[
                pl.BlockSpec((1, BP, I), lambda t: (t, 0, 0)),   # x_t slice
                pl.BlockSpec((BP, HP), lambda t: (0, 0)),        # h0 (resident)
                pl.BlockSpec((I, P), lambda t: (0, 0)),          # packed W_i (resident)
                pl.BlockSpec((HP, P), lambda t: (0, 0)),         # packed W_h (resident)
                pl.BlockSpec((1, P), lambda t: (0, 0)),          # packed bias (resident)
            ],
            out_specs=[
                pl.BlockSpec((1, BP, OP), lambda t: (t, 0, 0)),  # log-softmax per step
                pl.BlockSpec((1, BP, HP), lambda t: (t, 0, 0)),  # hidden per step
            ],
            scratch_shapes=[pltpu.VMEM((BP, HP), jnp.float32)],  # carried hidden
        ),
        compiler_params=pltpu.CompilerParams(
            dimension_semantics=("arbitrary",),  # sequential recurrence over time
        ),
    )(x_p, h0_p, w_in_packed, w_hid_packed, b_packed)

    # Strip batch / lane padding.
    return out_seq[:, :B, :O], hid_seq[:, :B, :H]


@jax.jit
def rnn_forward(input_tensor, hidden_tensor, wh_t, bh, wo_t, bo):
    """Exactly the module's forward (one step): returns (log_softmax_out, new_hidden)."""
    out_seq, hid_seq = rnn_sequence_forward(input_tensor[None], hidden_tensor,
                                            wh_t, bh, wo_t, bo)
    return out_seq[0], hid_seq[0]


def init_params(key, input_size, hidden_size, output_size):
    """Deterministic init mirroring nn.Linear's U(-1/sqrt(fan_in), 1/sqrt(fan_in)).

    Weights are stored pre-transposed: (in_features, out_features).
    """
    fan_in = input_size + hidden_size
    k = 1.0 / jnp.sqrt(jnp.float32(fan_in))
    k1, k2, k3, k4 = jax.random.split(key, 4)
    wh_t = jax.random.uniform(k1, (fan_in, hidden_size), jnp.float32, -k, k)
    bh = jax.random.uniform(k2, (1, hidden_size), jnp.float32, -k, k)
    wo_t = jax.random.uniform(k3, (fan_in, output_size), jnp.float32, -k, k)
    bo = jax.random.uniform(k4, (1, output_size), jnp.float32, -k, k)
    return wh_t, bh, wo_t, bo


if __name__ == "__main__":
    input_size, hidden_size, output_size = 16, 32, 8
    batch, seq_len = 2, 8

    key = jax.random.PRNGKey(0)
    kp, kx, kxs = jax.random.split(key, 3)

    wh_t, bh, wo_t, bo = init_params(kp, input_size, hidden_size, output_size)

    # ---- single step: exactly RNN.forward ----
    # NOTE: like the PyTorch module, NO tanh is applied to the hidden state.
    x = jax.random.normal(kx, (batch, input_size), jnp.float32)
    h0 = jnp.zeros((batch, hidden_size), jnp.float32)   # init_hidden, broadcast to batch

    out, hidden = rnn_forward(x, h0, wh_t, bh, wo_t, bo)
    jax.block_until_ready((out, hidden))

    combined = jnp.concatenate([x, h0], axis=1)
    ref_hidden = combined @ wh_t + bh
    ref_out = jax.nn.log_softmax(combined @ wo_t + bo, axis=1)
    assert jnp.allclose(out, ref_out, atol=1e-5), "single-step output mismatch"
    assert jnp.allclose(hidden, ref_hidden, atol=1e-5), "single-step hidden mismatch"

    # ---- full sequence: recurrence inside one kernel launch ----
    x_seq = jax.random.normal(kxs, (seq_len, batch, input_size), jnp.float32)
    out_seq, hid_seq = rnn_sequence_forward(x_seq, h0, wh_t, bh, wo_t, bo)
    jax.block_until_ready((out_seq, hid_seq))

    # Pure-JAX reference: apply the module's forward T times.
    h_ref = h0
    ref_outs, ref_hids = [], []
    for t in range(seq_len):
        c = jnp.concatenate([x_seq[t], h_ref], axis=1)
        h_ref = c @ wh_t + bh
        ref_hids.append(h_ref)
        ref_outs.append(jax.nn.log_softmax(c @ wo_t + bo, axis=1))
    ref_outs = jnp.stack(ref_outs)
    ref_hids = jnp.stack(ref_hids)
    assert jnp.allclose(out_seq, ref_outs, atol=1e-4), "sequence output mismatch"
    assert jnp.allclose(hid_seq, ref_hids, atol=1e-4), "sequence hidden mismatch"

    print("KERNEL_OK")
</pallas_src>

<mosaic_0001>
module attributes {stable_mosaic.version = 11 : i64} {
  func.func @_rnn_seq_kernel(%arg0: i32, %arg1: memref<1x8x16xf32, #tpu.memory_space<vmem>>, %arg2: memref<8x128xf32, #tpu.memory_space<vmem>>, %arg3: memref<16x256xf32, #tpu.memory_space<vmem>>, %arg4: memref<128x256xf32, #tpu.memory_space<vmem>>, %arg5: memref<1x256xf32, #tpu.memory_space<vmem>>, %arg6: memref<1x8x128xf32, #tpu.memory_space<vmem>>, %arg7: memref<1x8x128xf32, #tpu.memory_space<vmem>>, %arg8: memref<8x128xf32, #tpu.memory_space<vmem>>) attributes {dimension_semantics = [#tpu.dimension_semantics<arbitrary>], iteration_bounds = array<i64: 1>, scalar_prefetch = 0 : i64, scratch_operands = 1 : i64, tpu.core_type = #tpu.core_type<tc>, window_params = [{transform_indices = @transform_0, window_bounds = array<i64: 1, 8, 16>}, {pipeline_mode = #tpu.pipeline_mode<synchronous>, transform_indices = @transform_1, window_bounds = array<i64: 8, 128>}, {pipeline_mode = #tpu.pipeline_mode<synchronous>, transform_indices = @transform_2, window_bounds = array<i64: 16, 256>}, {pipeline_mode = #tpu.pipeline_mode<synchronous>, transform_indices = @transform_3, window_bounds = array<i64: 128, 256>}, {pipeline_mode = #tpu.pipeline_mode<synchronous>, transform_indices = @transform_4, window_bounds = array<i64: 1, 256>}, {transform_indices = @transform_5, window_bounds = array<i64: 1, 8, 128>}, {transform_indices = @transform_6, window_bounds = array<i64: 1, 8, 128>}]} {
    %c0_i32 = arith.constant 0 : i32
    %0 = arith.cmpi eq, %arg0, %c0_i32 : i32
    %1 = arith.extui %0 : i1 to i32
    %c0_i32_0 = arith.constant 0 : i32
    %2 = arith.cmpi ne, %1, %c0_i32_0 : i32
    scf.if %2 {
      %c0_24 = arith.constant 0 : index
      %c0_25 = arith.constant 0 : index
      %40 = vector.load %arg2[%c0_24, %c0_25] : memref<8x128xf32, #tpu.memory_space<vmem>>, vector<8x128xf32>
      %c0_26 = arith.constant 0 : index
      %c0_27 = arith.constant 0 : index
      %41 = vector.load %arg8[%c0_26, %c0_27] : memref<8x128xf32, #tpu.memory_space<vmem>>, vector<8x128xf32>
      tpu.vector_store %arg8[%c0_26, %c0_27], %40 {strides = array<i32>} : memref<8x128xf32, #tpu.memory_space<vmem>>, vector<8x128xf32>,
    } else {
    }
    %c0 = arith.constant 0 : index
    %c0_1 = arith.constant 0 : index
    %c0_2 = arith.constant 0 : index
    %3 = vector.load %arg1[%c0, %c0_1, %c0_2] : memref<1x8x16xf32, #tpu.memory_space<vmem>>, vector<1x8x16xf32>
    %4 = vector.shape_cast %3 : vector<1x8x16xf32> to vector<8x16xf32>
    %c0_3 = arith.constant 0 : index
    %c0_4 = arith.constant 0 : index
    %5 = vector.load %arg8[%c0_3, %c0_4] : memref<8x128xf32, #tpu.memory_space<vmem>>, vector<8x128xf32>
    %c0_5 = arith.constant 0 : index
    %c0_6 = arith.constant 0 : index
    %6 = vector.load %arg3[%c0_5, %c0_6] : memref<16x256xf32, #tpu.memory_space<vmem>>, vector<16x256xf32>
    %cst = arith.constant dense<0.000000e+00> : vector<8x256xf32>
    %7 = tpu.matmul %4, %6, %cst {dimension_numbers = #tpu.dot_dimension_numbers<[1], [0], [0], [1], [0, 0, 1, 1], [], []>} : vector<8x16xf32>, vector<16x256xf32>, vector<8x256xf32> -> vector<8x256xf32>
    %c0_7 = arith.constant 0 : index
    %c0_8 = arith.constant 0 : index
    %8 = vector.load %arg4[%c0_7, %c0_8] : memref<128x256xf32, #tpu.memory_space<vmem>>, vector<128x256xf32>
    %cst_9 = arith.constant dense<0.000000e+00> : vector<8x256xf32>
    %9 = tpu.matmul %5, %8, %cst_9 {dimension_numbers = #tpu.dot_dimension_numbers<[1], [0], [0], [1], [0, 0, 1, 1], [], []>} : vector<8x128xf32>, vector<128x256xf32>, vector<8x256xf32> -> vector<8x256xf32>
    %10 = arith.addf %7, %9 : vector<8x256xf32>
    %c0_10 = arith.constant 0 : index
    %c0_11 = arith.constant 0 : index
    %11 = vector.load %arg5[%c0_10, %c0_11] : memref<1x256xf32, #tpu.memory_space<vmem>>, vector<1x256xf32>
    %12 = vector.broadcast %11 : vector<1x256xf32> to vector<8x256xf32>
    %13 = arith.addf %10, %12 : vector<8x256xf32>
    %14 = vector.extract_strided_slice %13 {offsets = [0, 0], sizes = [8, 128], strides = [1, 1]} : vector<8x256xf32> to vector<8x128xf32>
    %15 = vector.extract_strided_slice %13 {offsets = [0, 128], sizes = [8, 128], strides = [1, 1]} : vector<8x256xf32> to vector<8x128xf32>
    %16 = tpu.iota {dimensions = array<i32: 1>} : vector<8x128xi32>
    %c8_i32 = arith.constant 8 : i32
    %17 = vector.broadcast %c8_i32 : i32 to vector<8x128xi32>
    %18 = arith.cmpi slt, %16, %17 : vector<8x128xi32>
    %cst_12 = arith.constant 0xFF800000 : f32
    %19 = vector.broadcast %cst_12 : f32 to vector<8x128xf32>
    %20 = arith.select %18, %15, %19 : vector<8x128xi1>, vector<8x128xf32>
    %cst_13 = arith.constant dense<0xFF800000> : vector<8xf32>
    %21 = vector.multi_reduction <maximumf>, %20, %cst_13 [1] : vector<8x128xf32> to vector<8xf32>
    %22 = vector.shape_cast %21 : vector<8xf32> to vector<8x1xf32>
    %23 = vector.broadcast %22 : vector<8x1xf32> to vector<8x128xf32>
    %24 = arith.subf %20, %23 : vector<8x128xf32>
    %25 = math.exp %24 : vector<8x128xf32>
    %cst_14 = arith.constant dense<0.000000e+00> : vector<8xf32>
    %26 = vector.multi_reduction <add>, %25, %cst_14 [1] : vector<8x128xf32> to vector<8xf32>
    %27 = vector.shape_cast %26 : vector<8xf32> to vector<8x1xf32>
    %28 = math.log %27 : vector<8x1xf32>
    %29 = vector.broadcast %28 : vector<8x1xf32> to vector<8x128xf32>
    %30 = arith.subf %24, %29 : vector<8x128xf32>
    %cst_15 = arith.constant 0.000000e+00 : f32
    %31 = vector.broadcast %cst_15 : f32 to vector<8x128xf32>
    %32 = arith.select %18, %30, %31 : vector<8x128xi1>, vector<8x128xf32>
    %c0_16 = arith.constant 0 : index
    %c0_17 = arith.constant 0 : index
    %33 = vector.load %arg8[%c0_16, %c0_17] : memref<8x128xf32, #tpu.memory_space<vmem>>, vector<8x128xf32>
    tpu.vector_store %arg8[%c0_16, %c0_17], %14 {strides = array<i32>} : memref<8x128xf32, #tpu.memory_space<vmem>>, vector<8x128xf32>,
    %c0_18 = arith.constant 0 : index
    %c0_19 = arith.constant 0 : index
    %c0_20 = arith.constant 0 : index
    %34 = vector.load %arg7[%c0_18, %c0_19, %c0_20] : memref<1x8x128xf32, #tpu.memory_space<vmem>>, vector<1x8x128xf32>
    %35 = vector.shape_cast %34 : vector<1x8x128xf32> to vector<8x128xf32>
    %36 = vector.shape_cast %14 : vector<8x128xf32> to vector<1x8x128xf32>
    tpu.vector_store %arg7[%c0_18, %c0_19, %c0_20], %36 {strides = array<i32>} : memref<1x8x128xf32, #tpu.memory_space<vmem>>, vector<1x8x128xf32>,
    %c0_21 = arith.constant 0 : index
    %c0_22 = arith.constant 0 : index
    %c0_23 = arith.constant 0 : index
    %37 = vector.load %arg6[%c0_21, %c0_22, %c0_23] : memref<1x8x128xf32, #tpu.memory_space<vmem>>, vector<1x8x128xf32>
    %38 = vector.shape_cast %37 : vector<1x8x128xf32> to vector<8x128xf32>
    %39 = vector.shape_cast %32 : vector<8x128xf32> to vector<1x8x128xf32>
    tpu.vector_store %arg6[%c0_21, %c0_22, %c0_23], %39 {strides = array<i32>} : memref<1x8x128xf32, #tpu.memory_space<vmem>>, vector<1x8x128xf32>,
    return
  }
  func.func @transform_0(%arg0: i32) -> (i32, i32, i32) {
    %c0_i32 = arith.constant 0 : i32
    %c0_i32_0 = arith.constant 0 : i32
    %c0_i32_1 = arith.constant 0 : i32
    return %arg0, %c0_i32, %c0_i32_0 : i32, i32, i32
  }
  func.func @transform_1(%arg0: i32) -> (i32, i32) {
    %c0_i32 = arith.constant 0 : i32
    %c0_i32_0 = arith.constant 0 : i32
    %c0_i32_1 = arith.constant 0 : i32
    return %c0_i32, %c0_i32_0 : i32, i32
  }
  func.func @transform_2(%arg0: i32) -> (i32, i32) {
    %c0_i32 = arith.constant 0 : i32
    %c0_i32_0 = arith.constant 0 : i32
    %c0_i32_1 = arith.constant 0 : i32
    return %c0_i32, %c0_i32_0 : i32, i32
  }
  func.func @transform_3(%arg0: i32) -> (i32, i32) {
    %c0_i32 = arith.constant 0 : i32
    %c0_i32_0 = arith.constant 0 : i32
    %c0_i32_1 = arith.constant 0 : i32
    return %c0_i32, %c0_i32_0 : i32, i32
  }
  func.func @transform_4(%arg0: i32) -> (i32, i32) {
    %c0_i32 = arith.constant 0 : i32
    %c0_i32_0 = arith.constant 0 : i32
    %c0_i32_1 = arith.constant 0 : i32
    return %c0_i32, %c0_i32_0 : i32, i32
  }
  func.func @transform_5(%arg0: i32) -> (i32, i32, i32) {
    %c0_i32 = arith.constant 0 : i32
    %c0_i32_0 = arith.constant 0 : i32
    %c0_i32_1 = arith.constant 0 : i32
    return %arg0, %c0_i32, %c0_i32_0 : i32, i32, i32
  }
  func.func @transform_6(%arg0: i32) -> (i32, i32, i32) {
    %c0_i32 = arith.constant 0 : i32
    %c0_i32_0 = arith.constant 0 : i32
    %c0_i32_1 = arith.constant 0 : i32
    return %arg0, %c0_i32, %c0_i32_0 : i32, i32, i32
  }
}

</mosaic_0001>

<llo_original>
// kernel: rnn_sequence_forward.1
$region0: #{rnn_sequence_forward.1}
  #allocation0 [shape = 'u32[]', space=smem, size = 0x4, offset = 0x4, fixed_abs, tag = 'smem constant byte address 0x4 - core index']
  #allocation1 [shape = 'u32[144,128]{1,0:T(1,128)}', space=vmem, size = 0x12000, scoped, tag = 'internal scratch']
  #allocation2 [shape = 'f32[8,128]{1,0:T(8,128)}', space=vmem, size = 0x1000, scoped, tag = 'scratch operand']
  %s0 = inlined_call_operand.vmem [shape: f32[1,8,16], index: 0, kind: input, shape index: {}]
  %s1 = inlined_call_operand.vmem [shape: f32[8,128], index: 1, kind: input, shape index: {}]
  %s2 = inlined_call_operand.vmem [shape: f32[16,256], index: 2, kind: input, shape index: {}]
  %s3 = inlined_call_operand.vmem [shape: f32[128,256], index: 3, kind: input, shape index: {}]
  %s4 = inlined_call_operand.vmem [shape: f32[1,256], index: 4, kind: input, shape index: {}]
  %s5 = inlined_call_operand.vmem [shape: f32[1,8,128], index: 5, kind: output, shape index: {0}]
  %s6 = inlined_call_operand.vmem [shape: f32[1,8,128], index: 6, kind: output, shape index: {1}]
  %7 = xla_tuple %s5, %s6
  %s8 = sld [smem:[#allocation0]]
  $region42: #{rnn_sequence_forward.1} parent=0
    _
  %s10 = ssub.s32 1, %s8
  %s11 = scalar_select 0, %s10, %s8
  // Predicated region
  $region2: #{rnn_sequence_forward.1} parent=0 // pred_check
    _
  $region3: #{rnn_sequence_forward.1} parent=0 // pred_check_branch
    %13 = sbr.rel (0) target = $region5
  $region4: #{rnn_sequence_forward.1} parent=0 // pred_region
    _
  $region5: #{rnn_sequence_forward.1} parent=0 // pred_fallthru
    _
  // Predicated region
  $region6: #{rnn_sequence_forward.1} parent=0 // pred_check
    _
  $region7: #{rnn_sequence_forward.1} parent=0 // pred_check_branch
    %15 = sbr.rel (0) target = $region9
  $region8: #{rnn_sequence_forward.1} parent=0 // pred_region
    _
  $region9: #{rnn_sequence_forward.1} parent=0 // pred_fallthru
    _
  // Predicated region
  $region10: #{rnn_sequence_forward.1} parent=0 // pred_check
    _
  $region11: #{rnn_sequence_forward.1} parent=0 // pred_check_branch
    %17 = sbr.rel (0) target = $region13
  $region12: #{rnn_sequence_forward.1} parent=0 // pred_region
    _
  $region13: #{rnn_sequence_forward.1} parent=0 // pred_fallthru
    _
  // Predicated region
  $region14: #{rnn_sequence_forward.1} parent=0 // pred_check
    _
  $region15: #{rnn_sequence_forward.1} parent=0 // pred_check_branch
    %19 = sbr.rel (0) target = $region17
  $region16: #{rnn_sequence_forward.1} parent=0 // pred_region
    _
  $region17: #{rnn_sequence_forward.1} parent=0 // pred_fallthru
    _
  // Predicated region
  $region18: #{rnn_sequence_forward.1} parent=0 // pred_check
    _
  $region19: #{rnn_sequence_forward.1} parent=0 // pred_check_branch
    %21 = sbr.rel (0) target = $region21
  $region20: #{rnn_sequence_forward.1} parent=0 // pred_region
    _
  $region21: #{rnn_sequence_forward.1} parent=0 // pred_fallthru
    _
  %p22 = scmp.eq.s32.totalorder 0, 0
  // Predicated region
  $region22: #{rnn_sequence_forward.1} parent=0 // pred_check
    %p23 = pneg %p22
  $region23: #{rnn_sequence_forward.1} parent=0 // pred_check_branch
    %25 = sbr.rel (%p23) target = $region25
  $region24: #{rnn_sequence_forward.1} parent=0 // pred_region
    %v26 = vld [vmem:[%s1] sm:$0xff]
    %27 = vst [vmem:[#allocation2] sm:$0xff] %v26
  $region25: #{rnn_sequence_forward.1} parent=0 // pred_fallthru
    _
  %v28 = vld [vmem:[%s0] sm:$0xff]
  %v29 = vld [vmem:[#allocation2] sm:$0xff]
  %v30 = vld [vmem:[%s2] sm:$0xff]
  %v31 = vld [vmem:[%s2 + $0x8] sm:$0xff]
  %v32 = vld [vmem:[%s2 + $0x10] sm:$0xff]
  %v33 = vld [vmem:[%s2 + $0x18] sm:$0xff]
  %v34 = vld [vmem:[%s3] sm:$0xff]
  %v35 = vld [vmem:[%s3 + $0x8] sm:$0xff]
  %v36 = vld [vmem:[%s3 + $0x10] sm:$0xff]
  %v37 = vld [vmem:[%s3 + $0x18] sm:$0xff]
  %v38 = vld [vmem:[%s3 + $0x20] sm:$0xff]
  %v39 = vld [vmem:[%s3 + $0x28] sm:$0xff]
  %v40 = vld [vmem:[%s3 + $0x30] sm:$0xff]
  %v41 = vld [vmem:[%s3 + $0x38] sm:$0xff]
  %v42 = vld [vmem:[%s3 + $0x40] sm:$0xff]
  %v43 = vld [vmem:[%s3 + $0x48] sm:$0xff]
  %v44 = vld [vmem:[%s3 + $0x50] sm:$0xff]
  %v45 = vld [vmem:[%s3 + $0x58] sm:$0xff]
  %v46 = vld [vmem:[%s3 + $0x60] sm:$0xff]
  %v47 = vld [vmem:[%s3 + $0x68] sm:$0xff]
  %v48 = vld [vmem:[%s3 + $0x70] sm:$0xff]
  %v49 = vld [vmem:[%s3 + $0x78] sm:$0xff]
  %v50 = vld [vmem:[%s3 + $0x80] sm:$0xff]
  %v51 = vld [vmem:[%s3 + $0x88] sm:$0xff]
  %v52 = vld [vmem:[%s3 + $0x90] sm:$0xff]
  %v53 = vld [vmem:[%s3 + $0x98] sm:$0xff]
  %v54 = vld [vmem:[%s3 + $0xa0] sm:$0xff]
  %v55 = vld [vmem:[%s3 + $0xa8] sm:$0xff]
  %v56 = vld [vmem:[%s3 + $0xb0] sm:$0xff]
  %v57 = vld [vmem:[%s3 + $0xb8] sm:$0xff]
  %v58 = vld [vmem:[%s3 + $0xc0] sm:$0xff]
  %v59 = vld [vmem:[%s3 + $0xc8] sm:$0xff]
  %v60 = vld [vmem:[%s3 + $0xd0] sm:$0xff]
  %v61 = vld [vmem:[%s3 + $0xd8] sm:$0xff]
  %v62 = vld [vmem:[%s3 + $0xe0] sm:$0xff]
  %v63 = vld [vmem:[%s3 + $0xe8] sm:$0xff]
  %v64 = vld [vmem:[%s3 + $0xf0] sm:$0xff]
  %v65 = vld [vmem:[%s3 + $0xf8] sm:$0xff]
  %66 = vmatprep.subr.mxu0 %v35
  %67 = vmatpush1.msra.mxu0 %v34
  %68 = vmatprep.subr.mxu0 %v37
  %69 = vmatpush1.msra.mxu0 %v36
  %70 = vmatprep.subr.mxu0 %v39
  %71 = vmatpush1.msra.mxu0 %v38
  %72 = vmatprep.subr.mxu0 %v41
  %73 = vmatpush1.msra.mxu0 %v40
  %74 = vmatprep.subr.mxu0 %v43
  %75 = vmatpush1.msra.mxu0 %v42
  %76 = vmatprep.subr.mxu0 %v45
  %77 = vmatpush1.msra.mxu0 %v44
  %78 = vmatprep.subr.mxu0 %v47
  %79 = vmatpush1.msra.mxu0 %v46
  %80 = vmatprep.subr.mxu0 %v49
  %81 = vmatpush1.msra.mxu0 %v48
  %82 = vmatprep.subr.mxu0 %v51
  %83 = vmatpush1.msra.mxu0 %v50
  %84 = vmatprep.subr.mxu0 %v53
  %85 = vmatpush1.msra.mxu0 %v52
  %86 = vmatprep.subr.mxu0 %v55
  %87 = vmatpush1.msra.mxu0 %v54
  %88 = vmatprep.subr.mxu0 %v57
  %89 = vmatpush1.msra.mxu0 %v56
  %90 = vmatprep.subr.mxu0 %v59
  %91 = vmatpush1.msra.mxu0 %v58
  %92 = vmatprep.subr.mxu0 %v61
  %93 = vmatpush1.msra.mxu0 %v60
  %94 = vmatprep.subr.mxu0 %v63
  %95 = vmatpush1.msra.mxu0 %v62
  %96 = vmatprep.subr.mxu0 %v65
  %97 = vmatpush1.msra.mxu0 %v64
  %98 = vmatprep.subr.mxu0 0.0
  %99 = vmatpush1.msra.mxu0 0.0
  %100 = vmatprep.subr.mxu0 0.0
  %101 = vmatpush1.msra.mxu0 0.0
  %102 = vmatprep.subr.mxu0 0.0
  %103 = vmatpush1.msra.mxu0 0.0
  %104 = vmatprep.subr.mxu0 0.0
  %105 = vmatpush1.msra.mxu0 0.0
  %106 = vmatprep.subr.mxu0 0.0
  %107 = vmatpush1.msra.mxu0 0.0
  %108 = vmatprep.subr.mxu0 0.0
  %109 = vmatpush1.msra.mxu0 0.0
  %110 = vmatprep.subr.mxu0 0.0
  %111 = vmatpush1.msra.mxu0 0.0
  %112 = vmatprep.subr.mxu0 0.0
  %113 = vmatpush1.msra.mxu0 0.0
  %114 = vmatprep.subr.mxu0 0.0
  %115 = vmatpush1.msra.mxu0 0.0
  %116 = vmatprep.subr.mxu0 0.0
  %117 = vmatpush1.msra.mxu0 0.0
  %118 = vmatprep.subr.mxu0 0.0
  %119 = vmatpush1.msra.mxu0 0.0
  %120 = vmatprep.subr.mxu0 0.0
  %121 = vmatpush1.msra.mxu0 0.0
  %122 = vmatprep.subr.mxu0 0.0
  %123 = vmatpush1.msra.mxu0 0.0
  %124 = vmatprep.subr.mxu0 0.0
  %125 = vmatpush1.msra.mxu0 0.0
  %126 = vmatprep.subr.mxu0 0.0
  %127 = vmatpush1.msra.mxu0 0.0
  %128 = vmatprep.subr.mxu0 0.0
  %129 = vmatpush1.msra.mxu0 0.0
  %130 = vmatprep.mubr.f32.mxu0 0.0
  %131 = vmatmul.mubr.f32.gmra.mrb[0].mxu0 %v29
  %v132 = vpop.f32.mrb[0].mxu0
  %v133 = vadd.f32 0.0, %v132
  %v134 = vpop.f32.mrb[0].mxu0
  %v135 = vadd.f32 0.0, %v134
  %136 = vdwg.mxu0
  %vm137 = vcmask 130048
  %v139 = vsel %vm137, %v28, 0
  %141 = vmatprep.subr.mxu0 %v31
  %142 = vmatpush1.msra.mxu0 %v30
  %143 = vmatprep.subr.mxu0 %v33
  %144 = vmatpush1.msra.mxu0 %v32
  %145 = vmatprep.subr.mxu0 0.0
  %146 = vmatpush1.msra.mxu0 0.0
  %147 = vmatprep.subr.mxu0 0.0
  %148 = vmatpush1.msra.mxu0 0.0
  %149 = vmatprep.subr.mxu0 0.0
  %150 = vmatpush1.msra.mxu0 0.0
  %151 = vmatprep.subr.mxu0 0.0
  %152 = vmatpush1.msra.mxu0 0.0
  %153 = vmatprep.subr.mxu0 0.0
  %154 = vmatpush1.msra.mxu0 0.0
  %155 = vmatprep.subr.mxu0 0.0
  %156 = vmatpush1.msra.mxu0 0.0
  %157 = vmatprep.subr.mxu0 0.0
  %158 = vmatpush1.msra.mxu0 0.0
  %159 = vmatprep.subr.mxu0 0.0
  %160 = vmatpush1.msra.mxu0 0.0
  %161 = vmatprep.subr.mxu0 0.0
  %162 = vmatpush1.msra.mxu0 0.0
  %163 = vmatprep.subr.mxu0 0.0
  %164 = vmatpush1.msra.mxu0 0.0
  %165 = vmatprep.subr.mxu0 0.0
  %166 = vmatpush1.msra.mxu0 0.0
  %167 = vmatprep.subr.mxu0 0.0
  %168 = vmatpush1.msra.mxu0 0.0
  %169 = vmatprep.subr.mxu0 0.0
  %170 = vmatpush1.msra.mxu0 0.0
  %171 = vmatprep.subr.mxu0 0.0
  %172 = vmatpush1.msra.mxu0 0.0
  %173 = vmatprep.subr.mxu0 0.0
  %174 = vmatpush1.msra.mxu0 0.0
  %175 = vmatprep.subr.mxu0 0.0
  %176 = vmatpush1.msra.mxu0 0.0
  %177 = vmatprep.subr.mxu0 0.0
  %178 = vmatpush1.msra.mxu0 0.0
  %179 = vmatprep.subr.mxu0 0.0
  %180 = vmatpush1.msra.mxu0 0.0
  %181 = vmatprep.subr.mxu0 0.0
  %182 = vmatpush1.msra.mxu0 0.0
  %183 = vmatprep.subr.mxu0 0.0
  %184 = vmatpush1.msra.mxu0 0.0
  %185 = vmatprep.subr.mxu0 0.0
  %186 = vmatpush1.msra.mxu0 0.0
  %187 = vmatprep.subr.mxu0 0.0
  %188 = vmatpush1.msra.mxu0 0.0
  %189 = vmatprep.subr.mxu0 0.0
  %190 = vmatpush1.msra.mxu0 0.0
  %191 = vmatprep.subr.mxu0 0.0
  %192 = vmatpush1.msra.mxu0 0.0
  %193 = vmatprep.subr.mxu0 0.0
  %194 = vmatpush1.msra.mxu0 0.0
  %195 = vmatprep.subr.mxu0 0.0
  %196 = vmatpush1.msra.mxu0 0.0
  %197 = vmatprep.subr.mxu0 0.0
  %198 = vmatpush1.msra.mxu0 0.0
  %199 = vmatprep.subr.mxu0 0.0
  %200 = vmatpush1.msra.mxu0 0.0
  %201 = vmatprep.subr.mxu0 0.0
  %202 = vmatpush1.msra.mxu0 0.0
  %203 = vmatprep.subr.mxu0 0.0
  %204 = vmatpush1.msra.mxu0 0.0
  %205 = vmatprep.mubr.f32.mxu0 0.0
  %206 = vmatmul.mubr.f32.gmra.mrb[0].mxu0 %v139
  %v207 = vpop.f32.mrb[0].mxu0
  %v208 = vadd.f32 %v133, %v207
  %v209 = vpop.f32.mrb[0].mxu0
  %v210 = vadd.f32 %v135, %v209
  %211 = vdwg.mxu0
  %v212 = vld [vmem:[%s4] sm:$0x3]
  %v214 = vlaneseq
  %v215 = vshrl.u32 %v214, 7
  %v216 = vsub.s32 0, %v215
  %v217 = vrot.slane %v212, %v216
  %v218 = vlaneseq
  %v219 = vshrl.u32 %v218, 7
  %v220 = vsub.s32 1, %v219
  %v221 = vrot.slane %v212, %v220
  %v224 = vadd.f32 %v208, %v217
  %v225 = vadd.f32 %v210, %v221
  %v226 = vlaneseq
  %v227 = vand.u32 %v226, 127
  %vm228 = vcmp.lt.s32.totalorder %v227, 8
  %v229 = vsel %vm228, %v225, -inf
  %230 = vmax.xlane.f32.xlu0 %v229
  %v231 = vpop.xlane.xlu0 %230
  %v232 = vsub.f32 %v229, %v231
  %v233 = vmul.f32 %v232, 1.442695
  %v234 = vpow.pop %v233
  %235 = vadd.xlane.f32.xlu0 %v234
  %v236 = vpop.xlane.xlu0 %235
  %v237 = vlog2.pop %v236
  %v238 = vmul.f32 %v237, 0.6931472
  %v239 = vsub.f32 %v232, %v238
  %v240 = vsel %vm228, %v239, 0.0
  %241 = vst [vmem:[#allocation2] sm:$0xff] %v224
  %242 = vst [vmem:[%s6] sm:$0xff] %v224
  %243 = vst [vmem:[%s5] sm:$0xff] %v240
  // Predicated region
  $region26: #{rnn_sequence_forward.1} parent=0 // pred_check
    _
  $region27: #{rnn_sequence_forward.1} parent=0 // pred_check_branch
    %245 = sbr.rel (0) target = $region29
  $region28: #{rnn_sequence_forward.1} parent=0 // pred_region
    _
  $region29: #{rnn_sequence_forward.1} parent=0 // pred_fallthru
    _
  // Predicated region
  $region30: #{rnn_sequence_forward.1} parent=0 // pred_check
    _
  $region31: #{rnn_sequence_forward.1} parent=0 // pred_check_branch
    %247 = sbr.rel (0) target = $region33
  $region32: #{rnn_sequence_forward.1} parent=0 // pred_region
    _
  $region33: #{rnn_sequence_forward.1} parent=0 // pred_fallthru
    _
  // Predicated region
  $region34: #{rnn_sequence_forward.1} parent=0 // pred_check
    _
  $region35: #{rnn_sequence_forward.1} parent=0 // pred_check_branch
    %249 = sbr.rel (0) target = $region37
  $region36: #{rnn_sequence_forward.1} parent=0 // pred_region
    _
  $region37: #{rnn_sequence_forward.1} parent=0 // pred_fallthru
    _
  // Predicated region
  $region38: #{rnn_sequence_forward.1} parent=0 // pred_check
    _
  $region39: #{rnn_sequence_forward.1} parent=0 // pred_check_branch
    %251 = sbr.rel (0) target = $region41
  $region40: #{rnn_sequence_forward.1} parent=0 // pred_region
    _
  $region41: #{rnn_sequence_forward.1} parent=0 // pred_fallthru
    _

</llo_original>
